<compile_context>
chip_gen: v7x
topology: tpu7x:2x2x1
jax: 0.10.0
libtpu: 0.0.40
codegen_flags: <defaults>
</compile_context>

<pallas_src>
import functools

import jax
import jax.numpy as jnp
from jax.experimental import pallas as pl
from jax.experimental.pallas import tpu as pltpu


def _round_up(v, m):
    return (v + m - 1) // m * m


def _linear_bn_act_kernel(x_ref, w_ref, shift_ref, o_ref, acc_ref, *, apply_relu):
    """One (tm, tn) output tile; K is the last grid axis (reduction)."""
    k = pl.program_id(2)

    @pl.when(k == 0)
    def _():
        acc_ref[...] = jnp.zeros_like(acc_ref)

    # MXU matmul with f32 accumulation (inputs may be bf16).
    acc_ref[...] += jnp.dot(x_ref[...], w_ref[...],
                            preferred_element_type=jnp.float32)

    @pl.when(k == pl.num_programs(2) - 1)
    def _():
        # BN is pre-folded: only the shift (and optional ReLU) remain. All f32.
        y = acc_ref[...] + shift_ref[...]
        if apply_relu:
            y = jnp.maximum(y, 0.0)
        o_ref[...] = y.astype(o_ref.dtype)


def linear_block_forward(x, w, gamma, beta, running_mean, running_var,
                         *, last=False, eps=1e-5, matmul_dtype=jnp.bfloat16):
    """Forward pass of LinearBlock (eval mode).

    Args:
      x:  [N, F_in] (any float dtype; cast like `x.float()` then to matmul_dtype for MXU)
      w:  [F_out, F_in]  (PyTorch nn.Linear weight layout, bias=False)
      gamma, beta, running_mean, running_var: [F_out] BatchNorm1d params / running stats
      last: if True, skip the ReLU (nn.Identity).
      matmul_dtype: dtype fed to the MXU (bf16 recommended on v6e/v7x; f32 for exact match).
    Returns:
      [N, F_out] float32
    """
    x = x.astype(jnp.float32)
    n, f_in = x.shape
    f_out = w.shape[0]

    # ---- Fold BatchNorm (eval) into the weight + a single shift row (f32). ----
    # NOTE: for inference, w_scaled / shift are static and should be precomputed
    # once outside the serving loop; under jit they are folded by XLA anyway.
    scale = (gamma.astype(jnp.float32)
             * jax.lax.rsqrt(running_var.astype(jnp.float32) + eps))     # [F_out]
    shift = beta.astype(jnp.float32) - running_mean.astype(jnp.float32) * scale
    w_scaled = jnp.transpose(w).astype(jnp.float32) * scale[None, :]      # [F_in, F_out]

    # ---- Tile sizes (multiples of (8, 128); sized well under v7x's 64 MiB VMEM). ----
    tm = min(256, _round_up(n, 8))
    tk = min(512, _round_up(f_in, 128))
    tn = min(512, _round_up(f_out, 128))

    m_pad = _round_up(n, tm)
    k_pad = _round_up(f_in, tk)
    n_pad = _round_up(f_out, tn)

    # ---- Zero-pad to lane-dense, tile-aligned shapes (sliced back after the call). ----
    x_p = jnp.pad(x, ((0, m_pad - n), (0, k_pad - f_in))).astype(matmul_dtype)
    w_p = jnp.pad(w_scaled, ((0, k_pad - f_in), (0, n_pad - f_out))).astype(matmul_dtype)
    shift_p = jnp.pad(shift, (0, n_pad - f_out)).reshape(1, n_pad)        # stays f32

    grid = (m_pad // tm, n_pad // tn, k_pad // tk)

    kernel = functools.partial(_linear_bn_act_kernel, apply_relu=(not last))

    itemsize = jnp.dtype(matmul_dtype).itemsize
    cost = pl.CostEstimate(
        flops=2 * m_pad * k_pad * n_pad,
        transcendentals=0,
        bytes_accessed=(m_pad * k_pad + k_pad * n_pad) * itemsize
                       + n_pad * 4 + m_pad * n_pad * 4,
    )

    grid_spec = pltpu.PrefetchScalarGridSpec(
        num_scalar_prefetch=0,
        grid=grid,
        in_specs=[
            pl.BlockSpec((tm, tk), lambda i, j, k: (i, k)),   # x tile
            pl.BlockSpec((tk, tn), lambda i, j, k: (k, j)),   # BN-scaled W^T tile
            pl.BlockSpec((1, tn), lambda i, j, k: (0, j)),    # shift row
        ],
        out_specs=pl.BlockSpec((tm, tn), lambda i, j, k: (i, j)),
        scratch_shapes=[pltpu.VMEM((tm, tn), jnp.float32)],   # f32 accumulator
    )

    out_p = pl.pallas_call(
        kernel,
        out_shape=jax.ShapeDtypeStruct((m_pad, n_pad), jnp.float32),
        grid_spec=grid_spec,
        compiler_params=pltpu.CompilerParams(
            dimension_semantics=("parallel", "parallel", "arbitrary"),
            vmem_limit_bytes=64 * 1024 * 1024,
        ),
        cost_estimate=cost,
    )(x_p, w_p, shift_p)

    return out_p[:n, :f_out]


def _reference(x, w, gamma, beta, mean, var, *, last, eps=1e-5):
    x = x.astype(jnp.float32)
    y = x @ w.T.astype(jnp.float32)
    y = (y - mean) / jnp.sqrt(var + eps) * gamma + beta
    if not last:
        y = jnp.maximum(y, 0.0)
    return y


if __name__ == "__main__":
    batch = 8
    input_size = 32
    output_size = 64

    key = jax.random.PRNGKey(0)
    kx, kw, kg, kb, km, kv = jax.random.split(key, 6)

    x = jax.random.normal(kx, (batch, input_size), dtype=jnp.float32)
    # nn.Linear weight: [out_features, in_features], bias=False.
    w = jax.random.normal(kw, (output_size, input_size), dtype=jnp.float32) * 0.1
    # BatchNorm1d parameters / running stats (deterministic, non-trivial).
    gamma = 1.0 + 0.1 * jax.random.normal(kg, (output_size,), dtype=jnp.float32)
    beta = 0.1 * jax.random.normal(kb, (output_size,), dtype=jnp.float32)
    running_mean = 0.1 * jax.random.normal(km, (output_size,), dtype=jnp.float32)
    running_var = 1.0 + 0.1 * jax.random.uniform(kv, (output_size,), dtype=jnp.float32)

    ref = _reference(x, w, gamma, beta, running_mean, running_var, last=False)

    # Exact-semantics check: f32 matmul path (matches PyTorch f32 math tightly).
    out_f32 = linear_block_forward(x, w, gamma, beta, running_mean, running_var,
                                   last=False, matmul_dtype=jnp.float32)
    out_f32 = jax.block_until_ready(out_f32)
    assert out_f32.shape == (batch, output_size)
    assert jnp.allclose(out_f32, ref, atol=1e-4, rtol=1e-4), "f32 path mismatch vs reference"

    # Fast path: bf16 MXU inputs, f32 accumulation + f32 epilogue.
    out_bf16 = linear_block_forward(x, w, gamma, beta, running_mean, running_var,
                                    last=False, matmul_dtype=jnp.bfloat16)
    out_bf16 = jax.block_until_ready(out_bf16)
    assert out_bf16.shape == (batch, output_size)
    assert jnp.allclose(out_bf16, ref, atol=5e-2, rtol=5e-2), "bf16 path mismatch vs reference"

    # Also check the `last=True` branch (Identity instead of ReLU).
    out_last = linear_block_forward(x, w, gamma, beta, running_mean, running_var,
                                    last=True, matmul_dtype=jnp.float32)
    out_last = jax.block_until_ready(out_last)
    ref_last = _reference(x, w, gamma, beta, running_mean, running_var, last=True)
    assert jnp.allclose(out_last, ref_last, atol=1e-4, rtol=1e-4), "last=True mismatch"

    print("KERNEL_OK")
</pallas_src>

<mosaic_0001>
module attributes {stable_mosaic.version = 11 : i64} {
  func.func @_linear_bn_act_kernel(%arg0: i32, %arg1: i32, %arg2: i32, %arg3: memref<8x128xf32, #tpu.memory_space<vmem>>, %arg4: memref<128x128xf32, #tpu.memory_space<vmem>>, %arg5: memref<1x128xf32, #tpu.memory_space<vmem>>, %arg6: memref<8x128xf32, #tpu.memory_space<vmem>>, %arg7: memref<8x128xf32, #tpu.memory_space<vmem>>) attributes {dimension_semantics = [#tpu.dimension_semantics<parallel>, #tpu.dimension_semantics<parallel>, #tpu.dimension_semantics<arbitrary>], iteration_bounds = array<i64: 1, 1, 1>, scalar_prefetch = 0 : i64, scratch_operands = 1 : i64, tpu.core_type = #tpu.core_type<tc>, window_params = [{transform_indices = @transform_0, window_bounds = array<i64: 8, 128>}, {transform_indices = @transform_1, window_bounds = array<i64: 128, 128>}, {transform_indices = @transform_2, window_bounds = array<i64: 1, 128>}, {transform_indices = @transform_3, window_bounds = array<i64: 8, 128>}]} {
    %c0_i32 = arith.constant 0 : i32
    %0 = arith.cmpi eq, %arg2, %c0_i32 : i32
    %1 = arith.extui %0 : i1 to i32
    %c0_i32_0 = arith.constant 0 : i32
    %2 = arith.cmpi ne, %1, %c0_i32_0 : i32
    scf.if %2 {
      %cst_10 = arith.constant 0.000000e+00 : f32
      %12 = vector.broadcast %cst_10 : f32 to vector<8x128xf32>
      %c0_11 = arith.constant 0 : index
      %c0_12 = arith.constant 0 : index
      %13 = vector.load %arg7[%c0_11, %c0_12] : memref<8x128xf32, #tpu.memory_space<vmem>>, vector<8x128xf32>
      tpu.vector_store %arg7[%c0_11, %c0_12], %12 {strides = array<i32>} : memref<8x128xf32, #tpu.memory_space<vmem>>, vector<8x128xf32>,
    } else {
    }
    %c0 = arith.constant 0 : index
    %c0_1 = arith.constant 0 : index
    %3 = vector.load %arg7[%c0, %c0_1] : memref<8x128xf32, #tpu.memory_space<vmem>>, vector<8x128xf32>
    %c0_2 = arith.constant 0 : index
    %c0_3 = arith.constant 0 : index
    %4 = vector.load %arg3[%c0_2, %c0_3] : memref<8x128xf32, #tpu.memory_space<vmem>>, vector<8x128xf32>
    %c0_4 = arith.constant 0 : index
    %c0_5 = arith.constant 0 : index
    %5 = vector.load %arg4[%c0_4, %c0_5] : memref<128x128xf32, #tpu.memory_space<vmem>>, vector<128x128xf32>
    %cst = arith.constant dense<0.000000e+00> : vector<8x128xf32>
    %6 = tpu.matmul %4, %5, %cst {dimension_numbers = #tpu.dot_dimension_numbers<[1], [0], [0], [1], [0, 0, 1, 1], [], []>} : vector<8x128xf32>, vector<128x128xf32>, vector<8x128xf32> -> vector<8x128xf32>
    %7 = arith.addf %3, %6 : vector<8x128xf32>
    %c0_6 = arith.constant 0 : index
    %c0_7 = arith.constant 0 : index
    %8 = vector.load %arg7[%c0_6, %c0_7] : memref<8x128xf32, #tpu.memory_space<vmem>>, vector<8x128xf32>
    tpu.vector_store %arg7[%c0_6, %c0_7], %7 {strides = array<i32>} : memref<8x128xf32, #tpu.memory_space<vmem>>, vector<8x128xf32>,
    %c0_i32_8 = arith.constant 0 : i32
    %9 = arith.cmpi eq, %arg2, %c0_i32_8 : i32
    %10 = arith.extui %9 : i1 to i32
    %c0_i32_9 = arith.constant 0 : i32
    %11 = arith.cmpi ne, %10, %c0_i32_9 : i32
    scf.if %11 {
      %c0_10 = arith.constant 0 : index
      %c0_11 = arith.constant 0 : index
      %12 = vector.load %arg7[%c0_10, %c0_11] : memref<8x128xf32, #tpu.memory_space<vmem>>, vector<8x128xf32>
      %c0_12 = arith.constant 0 : index
      %c0_13 = arith.constant 0 : index
      %13 = vector.load %arg5[%c0_12, %c0_13] : memref<1x128xf32, #tpu.memory_space<vmem>>, vector<1x128xf32>
      %14 = vector.broadcast %13 : vector<1x128xf32> to vector<8x128xf32>
      %15 = arith.addf %12, %14 : vector<8x128xf32>
      %cst_14 = arith.constant 0.000000e+00 : f32
      %16 = vector.broadcast %cst_14 : f32 to vector<8x128xf32>
      %17 = arith.maximumf %15, %16 : vector<8x128xf32>
      %c0_15 = arith.constant 0 : index
      %c0_16 = arith.constant 0 : index
      %18 = vector.load %arg6[%c0_15, %c0_16] : memref<8x128xf32, #tpu.memory_space<vmem>>, vector<8x128xf32>
      tpu.vector_store %arg6[%c0_15, %c0_16], %17 {strides = array<i32>} : memref<8x128xf32, #tpu.memory_space<vmem>>, vector<8x128xf32>,
    } else {
    }
    return
  }
  func.func @transform_0(%arg0: i32, %arg1: i32, %arg2: i32) -> (i32, i32) {
    %c0_i32 = arith.constant 0 : i32
    return %arg0, %arg2 : i32, i32
  }
  func.func @transform_1(%arg0: i32, %arg1: i32, %arg2: i32) -> (i32, i32) {
    %c0_i32 = arith.constant 0 : i32
    return %arg2, %arg1 : i32, i32
  }
  func.func @transform_2(%arg0: i32, %arg1: i32, %arg2: i32) -> (i32, i32) {
    %c0_i32 = arith.constant 0 : i32
    %c0_i32_0 = arith.constant 0 : i32
    return %c0_i32, %arg1 : i32, i32
  }
  func.func @transform_3(%arg0: i32, %arg1: i32, %arg2: i32) -> (i32, i32) {
    %c0_i32 = arith.constant 0 : i32
    return %arg0, %arg1 : i32, i32
  }
}

</mosaic_0001>

<llo_original>
// kernel: tpu_custom_call.1
$region0: #{tpu_custom_call.1}
  #allocation0 [shape = 'u32[]', space=smem, size = 0x4, offset = 0x4, fixed_abs, tag = 'smem constant byte address 0x4 - core index']
  #allocation1 [shape = 'u32[144,128]{1,0:T(1,128)}', space=vmem, size = 0x12000, scoped, tag = 'internal scratch']
  #allocation2 [shape = 'f32[8,128]{1,0:T(8,128)}', space=vmem, size = 0x1000, scoped, tag = 'scratch operand']
  %s0 = inlined_call_operand.hbm [shape: f32[8,128], index: 0, kind: input, shape index: {}]
  %s1 = inlined_call_operand.hbm [shape: f32[128,128], index: 1, kind: input, shape index: {}]
  %s2 = inlined_call_operand.hbm [shape: f32[1,128], index: 2, kind: input, shape index: {}]
  %s3 = inlined_call_operand.hbm [shape: f32[8,128], index: 3, kind: output, shape index: {}]
  %s4 = sld [smem:[#allocation0]]
  $region42: #{tpu_custom_call.1} parent=0
    _
  %s6 = ssub.s32 1, %s4
  %s7 = scalar_select 0, %s6, %s4
  $region1: #{tpu_custom_call.1} parent=0
    #allocation3 [shape = 'u8[4096]{0}', space=vmem, size = 0x1000, scoped, tag = 'input window, operand 0, single buffered']
    #allocation4 [shape = 's32[1]{0}', space=sflag, size = 0x4, scoped, tag = 'scoped memory for tpu_custom_call.1']
    #allocation5 [shape = 's32[1]{0}', space=sflag, size = 0x4, scoped, tag = 'scoped memory for tpu_custom_call.1']
    #allocation6 [shape = 'u8[65536]{0}', space=vmem, size = 0x10000, scoped, tag = 'input window, operand 1, single buffered']
    #allocation7 [shape = 's32[1]{0}', space=sflag, size = 0x4, scoped, tag = 'scoped memory for tpu_custom_call.1']
    #allocation8 [shape = 'u8[512]{0}', space=vmem, size = 0x400, scoped, tag = 'input window, operand 2, single buffered']
    #allocation9 [shape = 'u8[4096]{0}', space=vmem, size = 0x1000, scoped, tag = 'output window, operand 0, single buffered']
    %8 = vsyncpa [#allocation4], 0
    %9 = vsyncpa [#allocation7], 0
    %10 = vsyncpa [#allocation5], 0
    // Predicated region
    $region2: #{tpu_custom_call.1} parent=1 // pred_check
      _
    $region3: #{tpu_custom_call.1} parent=1 // pred_check_branch
      %12 = sbr.rel (0) target = $region5
    $region4: #{tpu_custom_call.1} parent=1 // pred_region
      %s14 = ssub.s32 128, 128
      %15 = vsyncadd [#allocation4], %s14
      %s17 = sshll.u32 [#allocation3], 4
      %s18 = int_to_ptr.vmem [resolvable:$true] %s17
      %20 = dma.hbm_to_vmem [thread:$0]  %s0, 128, %s18, [#allocation4]
    $region5: #{tpu_custom_call.1} parent=1 // pred_fallthru
      _
    // Predicated region
    $region6: #{tpu_custom_call.1} parent=1 // pred_check
      _
    $region7: #{tpu_custom_call.1} parent=1 // pred_check_branch
      %22 = sbr.rel (0) target = $region9
    $region8: #{tpu_custom_call.1} parent=1 // pred_region
      %s24 = ssub.s32 2048, 2048
      %25 = vsyncadd [#allocation7], %s24
      %s26 = sshll.u32 [#allocation6], 4
      %s27 = int_to_ptr.vmem [resolvable:$true] %s26
      %32 = dma.hbm_to_vmem [thread:$0]  %s1, 2048, %s27, [#allocation7], 128, 128, 8
    $region9: #{tpu_custom_call.1} parent=1 // pred_fallthru
      _
    // Predicated region
    $region10: #{tpu_custom_call.1} parent=1 // pred_check
      _
    $region11: #{tpu_custom_call.1} parent=1 // pred_check_branch
      %34 = sbr.rel (0) target = $region13
    $region12: #{tpu_custom_call.1} parent=1 // pred_region
      %s36 = ssub.s32 16, 16
      %37 = vsyncadd [#allocation7], %s36
      %s39 = sshll.u32 [#allocation8], 4
      %s40 = int_to_ptr.vmem [resolvable:$true] %s39
      %42 = dma.hbm_to_vmem [thread:$0]  %s2, 16, %s40, [#allocation7]
    $region13: #{tpu_custom_call.1} parent=1 // pred_fallthru
      _
    // Predicated region
    $region14: #{tpu_custom_call.1} parent=1 // pred_check
      _
    $region15: #{tpu_custom_call.1} parent=1 // pred_check_branch
      %44 = sbr.rel (0) target = $region17
    $region16: #{tpu_custom_call.1} parent=1 // pred_region
      %45 = dma.done [#allocation4], 128
    $region17: #{tpu_custom_call.1} parent=1 // pred_fallthru
      _
    // Predicated region
    $region18: #{tpu_custom_call.1} parent=1 // pred_check
      _
    $region19: #{tpu_custom_call.1} parent=1 // pred_check_branch
      %47 = sbr.rel (0) target = $region21
    $region20: #{tpu_custom_call.1} parent=1 // pred_region
      %48 = dma.done [#allocation7], 2048
    $region21: #{tpu_custom_call.1} parent=1 // pred_fallthru
      _
    // Predicated region
    $region22: #{tpu_custom_call.1} parent=1 // pred_check
      _
    $region23: #{tpu_custom_call.1} parent=1 // pred_check_branch
      %50 = sbr.rel (0) target = $region25
    $region24: #{tpu_custom_call.1} parent=1 // pred_region
      %51 = dma.done [#allocation7], 16
    $region25: #{tpu_custom_call.1} parent=1 // pred_fallthru
      _
    %p52 = scmp.eq.s32.totalorder 0, 0
    // Predicated region
    $region26: #{tpu_custom_call.1} parent=1 // pred_check
      %p53 = pneg %p52
    $region27: #{tpu_custom_call.1} parent=1 // pred_check_branch
      %55 = sbr.rel (%p53) target = $region29
    $region28: #{tpu_custom_call.1} parent=1 // pred_region
      %56 = vst [vmem:[#allocation2] sm:$0xff] 0.0
    $region29: #{tpu_custom_call.1} parent=1 // pred_fallthru
      _
    %v57 = vld [vmem:[#allocation2] sm:$0xff]
    %v58 = vld [vmem:[#allocation3] sm:$0xff]
    %v59 = vld [vmem:[#allocation6] sm:$0xff]
    %v60 = vld [vmem:[#allocation6 + $0x8] sm:$0xff]
    %v61 = vld [vmem:[#allocation6 + $0x10] sm:$0xff]
    %v62 = vld [vmem:[#allocation6 + $0x18] sm:$0xff]
    %v63 = vld [vmem:[#allocation6 + $0x20] sm:$0xff]
    %v64 = vld [vmem:[#allocation6 + $0x28] sm:$0xff]
    %v65 = vld [vmem:[#allocation6 + $0x30] sm:$0xff]
    %v66 = vld [vmem:[#allocation6 + $0x38] sm:$0xff]
    %v67 = vld [vmem:[#allocation6 + $0x40] sm:$0xff]
    %v68 = vld [vmem:[#allocation6 + $0x48] sm:$0xff]
    %v69 = vld [vmem:[#allocation6 + $0x50] sm:$0xff]
    %v70 = vld [vmem:[#allocation6 + $0x58] sm:$0xff]
    %v71 = vld [vmem:[#allocation6 + $0x60] sm:$0xff]
    %v72 = vld [vmem:[#allocation6 + $0x68] sm:$0xff]
    %v73 = vld [vmem:[#allocation6 + $0x70] sm:$0xff]
    %v74 = vld [vmem:[#allocation6 + $0x78] sm:$0xff]
    %75 = vmatprep.subr.mxu0 0.0
    %76 = vmatpush1.msra.mxu0 %v59
    %77 = vmatprep.subr.mxu0 0.0
    %78 = vmatpush1.msra.mxu0 %v60
    %79 = vmatprep.subr.mxu0 0.0
    %80 = vmatpush1.msra.mxu0 %v61
    %81 = vmatprep.subr.mxu0 0.0
    %82 = vmatpush1.msra.mxu0 %v62
    %83 = vmatprep.subr.mxu0 0.0
    %84 = vmatpush1.msra.mxu0 %v63
    %85 = vmatprep.subr.mxu0 0.0
    %86 = vmatpush1.msra.mxu0 %v64
    %87 = vmatprep.subr.mxu0 0.0
    %88 = vmatpush1.msra.mxu0 %v65
    %89 = vmatprep.subr.mxu0 0.0
    %90 = vmatpush1.msra.mxu0 %v66
    %91 = vmatprep.subr.mxu0 0.0
    %92 = vmatpush1.msra.mxu0 %v67
    %93 = vmatprep.subr.mxu0 0.0
    %94 = vmatpush1.msra.mxu0 %v68
    %95 = vmatprep.subr.mxu0 0.0
    %96 = vmatpush1.msra.mxu0 %v69
    %97 = vmatprep.subr.mxu0 0.0
    %98 = vmatpush1.msra.mxu0 %v70
    %99 = vmatprep.subr.mxu0 0.0
    %100 = vmatpush1.msra.mxu0 %v71
    %101 = vmatprep.subr.mxu0 0.0
    %102 = vmatpush1.msra.mxu0 %v72
    %103 = vmatprep.subr.mxu0 0.0
    %104 = vmatpush1.msra.mxu0 %v73
    %105 = vmatprep.subr.mxu0 0.0
    %106 = vmatpush1.msra.mxu0 %v74
    %107 = vmatprep.subr.mxu0 0.0
    %108 = vmatpush1.msra.mxu0 0.0
    %109 = vmatprep.subr.mxu0 0.0
    %110 = vmatpush1.msra.mxu0 0.0
    %111 = vmatprep.subr.mxu0 0.0
    %112 = vmatpush1.msra.mxu0 0.0
    %113 = vmatprep.subr.mxu0 0.0
    %114 = vmatpush1.msra.mxu0 0.0
    %115 = vmatprep.subr.mxu0 0.0
    %116 = vmatpush1.msra.mxu0 0.0
    %117 = vmatprep.subr.mxu0 0.0
    %118 = vmatpush1.msra.mxu0 0.0
    %119 = vmatprep.subr.mxu0 0.0
    %120 = vmatpush1.msra.mxu0 0.0
    %121 = vmatprep.subr.mxu0 0.0
    %122 = vmatpush1.msra.mxu0 0.0
    %123 = vmatprep.subr.mxu0 0.0
    %124 = vmatpush1.msra.mxu0 0.0
    %125 = vmatprep.subr.mxu0 0.0
    %126 = vmatpush1.msra.mxu0 0.0
    %127 = vmatprep.subr.mxu0 0.0
    %128 = vmatpush1.msra.mxu0 0.0
    %129 = vmatprep.subr.mxu0 0.0
    %130 = vmatpush1.msra.mxu0 0.0
    %131 = vmatprep.subr.mxu0 0.0
    %132 = vmatpush1.msra.mxu0 0.0
    %133 = vmatprep.subr.mxu0 0.0
    %134 = vmatpush1.msra.mxu0 0.0
    %135 = vmatprep.subr.mxu0 0.0
    %136 = vmatpush1.msra.mxu0 0.0
    %137 = vmatprep.subr.mxu0 0.0
    %138 = vmatpush1.msra.mxu0 0.0
    %139 = vmatprep.mubr.f32.mxu0 0.0
    %140 = vmatmul.mubr.f32.gmra.mrb[0].mxu0 %v58
    %v141 = vpop.f32.mrb[0].mxu0
    %v142 = vadd.f32 0.0, %v141
    %v143 = vpop.f32.mrb[0].mxu0
    %144 = vdwg.mxu0
    %v145 = vadd.f32 %v57, %v142
    %146 = vst [vmem:[#allocation2] sm:$0xff] %v145
    // Predicated region
    $region30: #{tpu_custom_call.1} parent=1 // pred_check
      %p147 = pneg %p52
    $region31: #{tpu_custom_call.1} parent=1 // pred_check_branch
      %149 = sbr.rel (%p147) target = $region33
    $region32: #{tpu_custom_call.1} parent=1 // pred_region
      %v150 = vld [vmem:[#allocation2] sm:$0xff]
      %v151 = vld [vmem:[#allocation8] sm:$0x1]
      %v153 = vlaneseq
      %v154 = vshrl.u32 %v153, 7
      %v155 = vsub.s32 0, %v154
      %v156 = vrot.slane %v151, %v155
      %v158 = vadd.f32 %v150, %v156
      %v159 = vmax.f32 %v158, 0.0
      %160 = vst [vmem:[#allocation9] sm:$0xff] %v159
    $region33: #{tpu_custom_call.1} parent=1 // pred_fallthru
      _
    // Predicated region
    $region34: #{tpu_custom_call.1} parent=1 // pred_check
      _
    $region35: #{tpu_custom_call.1} parent=1 // pred_check_branch
      %162 = sbr.rel (0) target = $region37
    $region36: #{tpu_custom_call.1} parent=1 // pred_region
      %s164 = ssub.s32 128, 128
      %165 = vsyncadd [#allocation5], %s164
      %s167 = sshll.u32 [#allocation9], 4
      %s168 = int_to_ptr.vmem [resolvable:$true] %s167
      %170 = dma.vmem_to_hbm [thread:$0]  %s168, 128, %s3, [#allocation5]
    $region37: #{tpu_custom_call.1} parent=1 // pred_fallthru
      _
    // Predicated region
    $region38: #{tpu_custom_call.1} parent=1 // pred_check
      _
    $region39: #{tpu_custom_call.1} parent=1 // pred_check_branch
      %172 = sbr.rel (0) target = $region41
    $region40: #{tpu_custom_call.1} parent=1 // pred_region
      %173 = dma.done [#allocation5], 128
    $region41: #{tpu_custom_call.1} parent=1 // pred_fallthru
      _
    %174 = vsyncpa [#allocation4], 1
    %175 = vsyncpa [#allocation7], 1
    %176 = vsyncpa [#allocation5], 1

</llo_original>
